<compile_context>
chip_gen: v7x
topology: tpu7x:2x2x1
jax: 0.10.0
libtpu: 0.0.40
codegen_flags: <defaults>
</compile_context>

<pallas_src>
import functools

import jax
import jax.numpy as jnp
from jax.experimental import pallas as pl
from jax.experimental.pallas import tpu as pltpu

_LANE = 128
_SUBLANE = 8
_MAX_TILE_ROWS = 1024  # 1024 x 128 f32 = 512 KiB per input block


def _round_up(x, m):
    return ((x + m - 1) // m) * m


def _tversky_sums_kernel(pred_ref, targ_ref,
                         inter_out, sump_out, sumt_out,
                         inter_acc, sump_acc, sumt_acc,
                         *, steps_per_split, tile_rows, rows_valid, needs_mask):
    i = pl.program_id(1)

    @pl.when(i == 0)
    def _():
        inter_acc[...] = jnp.zeros_like(inter_acc)
        sump_acc[...] = jnp.zeros_like(sump_acc)
        sumt_acc[...] = jnp.zeros_like(sumt_acc)

    # Upcast in-kernel (inputs stream in native dtype; bf16 halves HBM bytes).
    p = jax.nn.sigmoid(pred_ref[...].astype(jnp.float32))
    t = targ_ref[...].astype(jnp.float32)

    if needs_mask:
        # Mask rows of the (single) partial tail block.  Garbage rows read
        # past the array end are zeroed via where (robust to NaN/Inf garbage).
        block = pl.program_id(0) * steps_per_split + i
        row_ids = block * tile_rows + jax.lax.broadcasted_iota(
            jnp.int32, (tile_rows, _LANE), 0)
        valid = row_ids < rows_valid
        p = jnp.where(valid, p, 0.0)
        t = jnp.where(valid, t, 0.0)

    def fold(x):
        # (tile_rows, 128) -> (8, 128): reduce over the major axis only, which
        # lowers to plain VPU adds (no cross-lane/sublane XLU work per step).
        return jnp.sum(x.reshape(tile_rows // _SUBLANE, _SUBLANE, _LANE), axis=0)

    inter_acc[...] += fold(p * t)
    sump_acc[...] += fold(p)
    sumt_acc[...] += fold(t)

    @pl.when(i == steps_per_split - 1)
    def _():
        # Single full reduction per split, once.
        inter_out[...] = jnp.sum(inter_acc[...], keepdims=True)
        sump_out[...] = jnp.sum(sump_acc[...], keepdims=True)
        sumt_out[...] = jnp.sum(sumt_acc[...], keepdims=True)


def tversky_loss(pred, target, alpha=0.5, beta=0.5):
    """Pallas TPU implementation of TverskyLoss.forward.

    pred, target: arbitrary (matching) shapes, e.g. NCHW [N, C, H, W].
    Returns a float32 scalar.
    """
    assert pred.shape == target.shape
    n = pred.size

    pred_flat = jnp.ravel(pred)
    targ_flat = jnp.ravel(target)

    # Only pad (small, <128 elements) when the element count is not
    # lane-aligned; pad values are neutral (sigmoid(-1e30)=0, target=0).
    pad = (-n) % _LANE
    if pad:
        pred_flat = jnp.concatenate(
            [pred_flat, jnp.full((pad,), -1e30, pred_flat.dtype)])
        targ_flat = jnp.concatenate(
            [targ_flat, jnp.zeros((pad,), targ_flat.dtype)])
    rows = (n + pad) // _LANE

    tile_rows = min(_MAX_TILE_ROWS, _round_up(rows, _SUBLANE))
    total_blocks = (rows + tile_rows - 1) // tile_rows
    # Split across a leading parallel axis when it divides evenly: on dual-TC
    # chips (v7x / megacore) each core streams half the rows; on 1-TC chips it
    # just iterates sequentially at negligible cost.
    num_splits = 2 if (total_blocks >= 2 and total_blocks % 2 == 0) else 1
    steps_per_split = total_blocks // num_splits
    needs_mask = total_blocks * tile_rows > rows  # at most one partial tail tile

    pred2d = pred_flat.reshape(rows, _LANE)
    targ2d = targ_flat.reshape(rows, _LANE)

    kernel = functools.partial(
        _tversky_sums_kernel,
        steps_per_split=steps_per_split,
        tile_rows=tile_rows,
        rows_valid=rows,
        needs_mask=needs_mask)

    in_map = lambda c, i: (c * steps_per_split + i, 0)
    out_map = lambda c, i: (c, 0)

    sums_shape = jax.ShapeDtypeStruct((num_splits, 1), jnp.float32)
    inter_p, sump_p, sumt_p = pl.pallas_call(
        kernel,
        out_shape=(sums_shape, sums_shape, sums_shape),
        grid_spec=pltpu.PrefetchScalarGridSpec(
            num_scalar_prefetch=0,
            grid=(num_splits, steps_per_split),
            in_specs=[
                pl.BlockSpec((tile_rows, _LANE), in_map),
                pl.BlockSpec((tile_rows, _LANE), in_map),
            ],
            out_specs=[
                pl.BlockSpec((1, 1), out_map),
                pl.BlockSpec((1, 1), out_map),
                pl.BlockSpec((1, 1), out_map),
            ],
            scratch_shapes=[pltpu.VMEM((_SUBLANE, _LANE), jnp.float32)] * 3,
        ),
        compiler_params=pltpu.CompilerParams(
            dimension_semantics=("parallel", "arbitrary")),
    )(pred2d, targ2d)

    # Combine the tiny per-split partials and form the Tversky ratio.
    inter = jnp.sum(inter_p)
    sum_p = jnp.sum(sump_p)
    sum_t = jnp.sum(sumt_p)
    fps = sum_p - inter          # sum(p * (1 - t))
    fns = sum_t - inter          # sum((1 - p) * t)
    smooth = jnp.float32(1.0)
    tversky = (inter + smooth) / (
        inter + jnp.float32(alpha) * fps + jnp.float32(beta) * fns + smooth)
    return (jnp.float32(1.0) - tversky).astype(jnp.float32)


def _tversky_ref(pred, target, alpha=0.5, beta=0.5):
    smooth = 1.0
    p = jax.nn.sigmoid(pred.astype(jnp.float32))
    t = target.astype(jnp.float32)
    inter = jnp.sum(p * t)
    fps = jnp.sum(p * (1.0 - t))
    fns = jnp.sum((1.0 - p) * t)
    return 1.0 - (inter + smooth) / (inter + alpha * fps + beta * fns + smooth)


if __name__ == "__main__":
    key = jax.random.PRNGKey(0)
    k1, k2 = jax.random.split(key)
    # NCHW, small shapes: batch=2, channels=4, spatial=16x16
    pred = jax.random.normal(k1, (2, 4, 16, 16), dtype=jnp.float32)
    target = (jax.random.uniform(k2, (2, 4, 16, 16)) > 0.5).astype(jnp.float32)

    loss = jax.block_until_ready(tversky_loss(pred, target, alpha=0.5, beta=0.5))
    ref = jax.block_until_ready(_tversky_ref(pred, target, alpha=0.5, beta=0.5))

    assert jnp.allclose(loss, ref, atol=1e-5, rtol=1e-5), (loss, ref)
    print("KERNEL_OK")
</pallas_src>

<mosaic_0001>
module attributes {stable_mosaic.version = 11 : i64} {
  func.func @_tversky_sums_kernel(%arg0: i32, %arg1: i32, %arg2: memref<16x128xf32, #tpu.memory_space<vmem>>, %arg3: memref<16x128xf32, #tpu.memory_space<vmem>>, %arg4: memref<1x1xf32, #tpu.memory_space<vmem>>, %arg5: memref<1x1xf32, #tpu.memory_space<vmem>>, %arg6: memref<1x1xf32, #tpu.memory_space<vmem>>, %arg7: memref<8x128xf32, #tpu.memory_space<vmem>>, %arg8: memref<8x128xf32, #tpu.memory_space<vmem>>, %arg9: memref<8x128xf32, #tpu.memory_space<vmem>>) attributes {dimension_semantics = [#tpu.dimension_semantics<parallel>, #tpu.dimension_semantics<arbitrary>], iteration_bounds = array<i64: 1, 1>, scalar_prefetch = 0 : i64, scratch_operands = 3 : i64, tpu.core_type = #tpu.core_type<tc>, window_params = [{transform_indices = @transform_0, window_bounds = array<i64: 16, 128>}, {transform_indices = @transform_1, window_bounds = array<i64: 16, 128>}, {transform_indices = @transform_2, window_bounds = array<i64: 1, 1>}, {transform_indices = @transform_3, window_bounds = array<i64: 1, 1>}, {transform_indices = @transform_4, window_bounds = array<i64: 1, 1>}]} {
    %c0_i32 = arith.constant 0 : i32
    %0 = arith.cmpi eq, %arg1, %c0_i32 : i32
    %1 = arith.extui %0 : i1 to i32
    %c0_i32_0 = arith.constant 0 : i32
    %2 = arith.cmpi ne, %1, %c0_i32_0 : i32
    scf.if %2 {
      %cst_21 = arith.constant 0.000000e+00 : f32
      %29 = vector.broadcast %cst_21 : f32 to vector<8x128xf32>
      %c0_22 = arith.constant 0 : index
      %c0_23 = arith.constant 0 : index
      %30 = vector.load %arg7[%c0_22, %c0_23] : memref<8x128xf32, #tpu.memory_space<vmem>>, vector<8x128xf32>
      tpu.vector_store %arg7[%c0_22, %c0_23], %29 {strides = array<i32>} : memref<8x128xf32, #tpu.memory_space<vmem>>, vector<8x128xf32>,
      %cst_24 = arith.constant 0.000000e+00 : f32
      %31 = vector.broadcast %cst_24 : f32 to vector<8x128xf32>
      %c0_25 = arith.constant 0 : index
      %c0_26 = arith.constant 0 : index
      %32 = vector.load %arg8[%c0_25, %c0_26] : memref<8x128xf32, #tpu.memory_space<vmem>>, vector<8x128xf32>
      tpu.vector_store %arg8[%c0_25, %c0_26], %31 {strides = array<i32>} : memref<8x128xf32, #tpu.memory_space<vmem>>, vector<8x128xf32>,
      %cst_27 = arith.constant 0.000000e+00 : f32
      %33 = vector.broadcast %cst_27 : f32 to vector<8x128xf32>
      %c0_28 = arith.constant 0 : index
      %c0_29 = arith.constant 0 : index
      %34 = vector.load %arg9[%c0_28, %c0_29] : memref<8x128xf32, #tpu.memory_space<vmem>>, vector<8x128xf32>
      tpu.vector_store %arg9[%c0_28, %c0_29], %33 {strides = array<i32>} : memref<8x128xf32, #tpu.memory_space<vmem>>, vector<8x128xf32>,
    } else {
    }
    %c0 = arith.constant 0 : index
    %c0_1 = arith.constant 0 : index
    %3 = vector.load %arg2[%c0, %c0_1] : memref<16x128xf32, #tpu.memory_space<vmem>>, vector<16x128xf32>
    %4 = arith.negf %3 : vector<16x128xf32>
    %5 = math.exp %4 : vector<16x128xf32>
    %cst = arith.constant 1.000000e+00 : f32
    %6 = vector.broadcast %cst : f32 to vector<16x128xf32>
    %7 = arith.addf %6, %5 : vector<16x128xf32>
    %8 = arith.divf %6, %7 : vector<16x128xf32>
    %c0_2 = arith.constant 0 : index
    %c0_3 = arith.constant 0 : index
    %9 = vector.load %arg3[%c0_2, %c0_3] : memref<16x128xf32, #tpu.memory_space<vmem>>, vector<16x128xf32>
    %c0_4 = arith.constant 0 : index
    %c0_5 = arith.constant 0 : index
    %10 = vector.load %arg7[%c0_4, %c0_5] : memref<8x128xf32, #tpu.memory_space<vmem>>, vector<8x128xf32>
    %11 = arith.mulf %8, %9 : vector<16x128xf32>
    %12 = vector.shape_cast %11 : vector<16x128xf32> to vector<2x8x128xf32>
    %cst_6 = arith.constant dense<0.000000e+00> : vector<8x128xf32>
    %13 = vector.multi_reduction <add>, %12, %cst_6 [0] : vector<2x8x128xf32> to vector<8x128xf32>
    %14 = arith.addf %10, %13 : vector<8x128xf32>
    %c0_7 = arith.constant 0 : index
    %c0_8 = arith.constant 0 : index
    %15 = vector.load %arg7[%c0_7, %c0_8] : memref<8x128xf32, #tpu.memory_space<vmem>>, vector<8x128xf32>
    tpu.vector_store %arg7[%c0_7, %c0_8], %14 {strides = array<i32>} : memref<8x128xf32, #tpu.memory_space<vmem>>, vector<8x128xf32>,
    %c0_9 = arith.constant 0 : index
    %c0_10 = arith.constant 0 : index
    %16 = vector.load %arg8[%c0_9, %c0_10] : memref<8x128xf32, #tpu.memory_space<vmem>>, vector<8x128xf32>
    %17 = vector.shape_cast %8 : vector<16x128xf32> to vector<2x8x128xf32>
    %cst_11 = arith.constant dense<0.000000e+00> : vector<8x128xf32>
    %18 = vector.multi_reduction <add>, %17, %cst_11 [0] : vector<2x8x128xf32> to vector<8x128xf32>
    %19 = arith.addf %16, %18 : vector<8x128xf32>
    %c0_12 = arith.constant 0 : index
    %c0_13 = arith.constant 0 : index
    %20 = vector.load %arg8[%c0_12, %c0_13] : memref<8x128xf32, #tpu.memory_space<vmem>>, vector<8x128xf32>
    tpu.vector_store %arg8[%c0_12, %c0_13], %19 {strides = array<i32>} : memref<8x128xf32, #tpu.memory_space<vmem>>, vector<8x128xf32>,
    %c0_14 = arith.constant 0 : index
    %c0_15 = arith.constant 0 : index
    %21 = vector.load %arg9[%c0_14, %c0_15] : memref<8x128xf32, #tpu.memory_space<vmem>>, vector<8x128xf32>
    %22 = vector.shape_cast %9 : vector<16x128xf32> to vector<2x8x128xf32>
    %cst_16 = arith.constant dense<0.000000e+00> : vector<8x128xf32>
    %23 = vector.multi_reduction <add>, %22, %cst_16 [0] : vector<2x8x128xf32> to vector<8x128xf32>
    %24 = arith.addf %21, %23 : vector<8x128xf32>
    %c0_17 = arith.constant 0 : index
    %c0_18 = arith.constant 0 : index
    %25 = vector.load %arg9[%c0_17, %c0_18] : memref<8x128xf32, #tpu.memory_space<vmem>>, vector<8x128xf32>
    tpu.vector_store %arg9[%c0_17, %c0_18], %24 {strides = array<i32>} : memref<8x128xf32, #tpu.memory_space<vmem>>, vector<8x128xf32>,
    %c0_i32_19 = arith.constant 0 : i32
    %26 = arith.cmpi eq, %arg1, %c0_i32_19 : i32
    %27 = arith.extui %26 : i1 to i32
    %c0_i32_20 = arith.constant 0 : i32
    %28 = arith.cmpi ne, %27, %c0_i32_20 : i32
    scf.if %28 {
      %c0_21 = arith.constant 0 : index
      %c0_22 = arith.constant 0 : index
      %29 = vector.load %arg7[%c0_21, %c0_22] : memref<8x128xf32, #tpu.memory_space<vmem>>, vector<8x128xf32>
      %30 = vector.shape_cast %29 : vector<8x128xf32> to vector<1x8x128xf32>
      %cst_23 = arith.constant dense<0.000000e+00> : vector<1xf32>
      %31 = vector.multi_reduction <add>, %30, %cst_23 [1, 2] : vector<1x8x128xf32> to vector<1xf32>
      %32 = vector.shape_cast %31 : vector<1xf32> to vector<1x1x1xf32>
      %33 = vector.extract %32[0, 0, 0] : f32 from vector<1x1x1xf32>
      %34 = vector.broadcast %33 : f32 to vector<1x1xf32>
      %c0_24 = arith.constant 0 : index
      %c0_25 = arith.constant 0 : index
      %35 = vector.load %arg4[%c0_24, %c0_25] : memref<1x1xf32, #tpu.memory_space<vmem>>, vector<1x1xf32>
      tpu.vector_store %arg4[%c0_24, %c0_25], %34 {strides = array<i32>} : memref<1x1xf32, #tpu.memory_space<vmem>>, vector<1x1xf32>,
      %c0_26 = arith.constant 0 : index
      %c0_27 = arith.constant 0 : index
      %36 = vector.load %arg8[%c0_26, %c0_27] : memref<8x128xf32, #tpu.memory_space<vmem>>, vector<8x128xf32>
      %37 = vector.shape_cast %36 : vector<8x128xf32> to vector<1x8x128xf32>
      %cst_28 = arith.constant dense<0.000000e+00> : vector<1xf32>
      %38 = vector.multi_reduction <add>, %37, %cst_28 [1, 2] : vector<1x8x128xf32> to vector<1xf32>
      %39 = vector.shape_cast %38 : vector<1xf32> to vector<1x1x1xf32>
      %40 = vector.extract %39[0, 0, 0] : f32 from vector<1x1x1xf32>
      %41 = vector.broadcast %40 : f32 to vector<1x1xf32>
      %c0_29 = arith.constant 0 : index
      %c0_30 = arith.constant 0 : index
      %42 = vector.load %arg5[%c0_29, %c0_30] : memref<1x1xf32, #tpu.memory_space<vmem>>, vector<1x1xf32>
      tpu.vector_store %arg5[%c0_29, %c0_30], %41 {strides = array<i32>} : memref<1x1xf32, #tpu.memory_space<vmem>>, vector<1x1xf32>,
      %c0_31 = arith.constant 0 : index
      %c0_32 = arith.constant 0 : index
      %43 = vector.load %arg9[%c0_31, %c0_32] : memref<8x128xf32, #tpu.memory_space<vmem>>, vector<8x128xf32>
      %44 = vector.shape_cast %43 : vector<8x128xf32> to vector<1x8x128xf32>
      %cst_33 = arith.constant dense<0.000000e+00> : vector<1xf32>
      %45 = vector.multi_reduction <add>, %44, %cst_33 [1, 2] : vector<1x8x128xf32> to vector<1xf32>
      %46 = vector.shape_cast %45 : vector<1xf32> to vector<1x1x1xf32>
      %47 = vector.extract %46[0, 0, 0] : f32 from vector<1x1x1xf32>
      %48 = vector.broadcast %47 : f32 to vector<1x1xf32>
      %c0_34 = arith.constant 0 : index
      %c0_35 = arith.constant 0 : index
      %49 = vector.load %arg6[%c0_34, %c0_35] : memref<1x1xf32, #tpu.memory_space<vmem>>, vector<1x1xf32>
      tpu.vector_store %arg6[%c0_34, %c0_35], %48 {strides = array<i32>} : memref<1x1xf32, #tpu.memory_space<vmem>>, vector<1x1xf32>,
    } else {
    }
    return
  }
  func.func @transform_0(%arg0: i32, %arg1: i32) -> (i32, i32) {
    %c1_i32 = arith.constant 1 : i32
    %0 = arith.muli %arg0, %c1_i32 : i32
    %1 = arith.addi %0, %arg1 : i32
    %c0_i32 = arith.constant 0 : i32
    %c0_i32_0 = arith.constant 0 : i32
    return %1, %c0_i32 : i32, i32
  }
  func.func @transform_1(%arg0: i32, %arg1: i32) -> (i32, i32) {
    %c1_i32 = arith.constant 1 : i32
    %0 = arith.muli %arg0, %c1_i32 : i32
    %1 = arith.addi %0, %arg1 : i32
    %c0_i32 = arith.constant 0 : i32
    %c0_i32_0 = arith.constant 0 : i32
    return %1, %c0_i32 : i32, i32
  }
  func.func @transform_2(%arg0: i32, %arg1: i32) -> (i32, i32) {
    %c0_i32 = arith.constant 0 : i32
    %c0_i32_0 = arith.constant 0 : i32
    return %arg0, %c0_i32 : i32, i32
  }
  func.func @transform_3(%arg0: i32, %arg1: i32) -> (i32, i32) {
    %c0_i32 = arith.constant 0 : i32
    %c0_i32_0 = arith.constant 0 : i32
    return %arg0, %c0_i32 : i32, i32
  }
  func.func @transform_4(%arg0: i32, %arg1: i32) -> (i32, i32) {
    %c0_i32 = arith.constant 0 : i32
    %c0_i32_0 = arith.constant 0 : i32
    return %arg0, %c0_i32 : i32, i32
  }
}

</mosaic_0001>

<llo_original>
// kernel: tpu_custom_call.1
$region0: #{tpu_custom_call.1}
  #allocation0 [shape = 'u32[]', space=smem, size = 0x4, offset = 0x4, fixed_abs, tag = 'smem constant byte address 0x4 - core index']
  #allocation1 [shape = 'u32[144,128]{1,0:T(1,128)}', space=vmem, size = 0x12000, scoped, tag = 'internal scratch']
  #allocation2 [shape = 'f32[8,128]{1,0:T(8,128)}', space=vmem, size = 0x1000, scoped, tag = 'scratch operand']
  #allocation3 [shape = 'f32[8,128]{1,0:T(8,128)}', space=vmem, size = 0x1000, scoped, tag = 'scratch operand']
  #allocation4 [shape = 'f32[8,128]{1,0:T(8,128)}', space=vmem, size = 0x1000, scoped, tag = 'scratch operand']
  %s0 = inlined_call_operand.hbm [shape: f32[16,128], index: 0, kind: input, shape index: {}]
  %s1 = inlined_call_operand.hbm [shape: f32[16,128], index: 1, kind: input, shape index: {}]
  %s2 = inlined_call_operand.hbm [shape: f32[1,1], index: 2, kind: output, shape index: {0}]
  %s3 = inlined_call_operand.hbm [shape: f32[1,1], index: 3, kind: output, shape index: {1}]
  %s4 = inlined_call_operand.hbm [shape: f32[1,1], index: 4, kind: output, shape index: {2}]
  %5 = xla_tuple %s2, %s3, %s4
  %s6 = sld [smem:[#allocation0]]
  $region50: #{tpu_custom_call.1} parent=0
    _
  %s8 = ssub.s32 1, %s6
  %s9 = scalar_select 0, %s8, %s6
  $region1: #{tpu_custom_call.1} parent=0
    #allocation5 [shape = 'u8[8192]{0}', space=vmem, size = 0x2000, scoped, tag = 'input window, operand 0, single buffered']
    #allocation6 [shape = 's32[1]{0}', space=sflag, size = 0x4, scoped, tag = 'scoped memory for tpu_custom_call.1']
    #allocation7 [shape = 's32[1]{0}', space=sflag, size = 0x4, scoped, tag = 'scoped memory for tpu_custom_call.1']
    #allocation8 [shape = 'u8[8192]{0}', space=vmem, size = 0x2000, scoped, tag = 'input window, operand 1, single buffered']
    #allocation9 [shape = 's32[1]{0}', space=sflag, size = 0x4, scoped, tag = 'scoped memory for tpu_custom_call.1']
    #allocation10 [shape = 'u8[512]{0}', space=vmem, size = 0x400, scoped, tag = 'output window, operand 0, single buffered']
    #allocation11 [shape = 'u8[512]{0}', space=vmem, size = 0x400, scoped, tag = 'output window, operand 1, single buffered']
    #allocation12 [shape = 's32[1]{0}', space=sflag, size = 0x4, scoped, tag = 'scoped memory for tpu_custom_call.1']
    #allocation13 [shape = 'u8[512]{0}', space=vmem, size = 0x400, scoped, tag = 'output window, operand 2, single buffered']
    %10 = vsyncpa [#allocation6], 0
    %11 = vsyncpa [#allocation9], 0
    %12 = vsyncpa [#allocation7], 0
    %13 = vsyncpa [#allocation12], 0
    // Predicated region
    $region2: #{tpu_custom_call.1} parent=1 // pred_check
      _
    $region3: #{tpu_custom_call.1} parent=1 // pred_check_branch
      %15 = sbr.rel (0) target = $region5
    $region4: #{tpu_custom_call.1} parent=1 // pred_region
      %s16 = sadd.s32 0, 0
      %s17 = smul.u32 2, %s16
      %s19 = ssub.s32 256, 256
      %20 = vsyncadd [#allocation6], %s19
      %s21 = smul.addr %s17, 128
      %s22 = scalar_lea.hbm %s0, %s21
      %s23 = sshll.u32 [#allocation5], 4
      %s24 = int_to_ptr.vmem [resolvable:$true] %s23
      %29 = dma.hbm_to_vmem [thread:$0]  %s22, 256, %s24, [#allocation6], 128, 128, 8
    $region5: #{tpu_custom_call.1} parent=1 // pred_fallthru
      _
    // Predicated region
    $region6: #{tpu_custom_call.1} parent=1 // pred_check
      _
    $region7: #{tpu_custom_call.1} parent=1 // pred_check_branch
      %31 = sbr.rel (0) target = $region9
    $region8: #{tpu_custom_call.1} parent=1 // pred_region
      %s32 = sadd.s32 0, 0
      %s33 = smul.u32 2, %s32
      %s35 = ssub.s32 256, 256
      %36 = vsyncadd [#allocation9], %s35
      %s37 = smul.addr %s33, 128
      %s38 = scalar_lea.hbm %s1, %s37
      %s39 = sshll.u32 [#allocation8], 4
      %s40 = int_to_ptr.vmem [resolvable:$true] %s39
      %45 = dma.hbm_to_vmem [thread:$0]  %s38, 256, %s40, [#allocation9], 128, 128, 8
    $region9: #{tpu_custom_call.1} parent=1 // pred_fallthru
      _
    // Predicated region
    $region10: #{tpu_custom_call.1} parent=1 // pred_check
      _
    $region11: #{tpu_custom_call.1} parent=1 // pred_check_branch
      %47 = sbr.rel (0) target = $region13
    $region12: #{tpu_custom_call.1} parent=1 // pred_region
      %48 = dma.done [#allocation6], 256
    $region13: #{tpu_custom_call.1} parent=1 // pred_fallthru
      _
    // Predicated region
    $region14: #{tpu_custom_call.1} parent=1 // pred_check
      _
    $region15: #{tpu_custom_call.1} parent=1 // pred_check_branch
      %50 = sbr.rel (0) target = $region17
    $region16: #{tpu_custom_call.1} parent=1 // pred_region
      %51 = dma.done [#allocation9], 256
    $region17: #{tpu_custom_call.1} parent=1 // pred_fallthru
      _
    %s52 = sadd.s32 0, 0
    %s53 = smul.u32 2, %s52
    %s54 = sadd.s32 0, 0
    %s55 = smul.u32 2, %s54
    %p56 = scmp.eq.s32.totalorder 0, 0
    // Predicated region
    $region18: #{tpu_custom_call.1} parent=1 // pred_check
      %p57 = pneg %p56
    $region19: #{tpu_custom_call.1} parent=1 // pred_check_branch
      %59 = sbr.rel (%p57) target = $region21
    $region20: #{tpu_custom_call.1} parent=1 // pred_region
      %60 = vst [vmem:[#allocation2] sm:$0xff] 0.0
      %61 = vst [vmem:[#allocation3] sm:$0xff] 0.0
      %62 = vst [vmem:[#allocation4] sm:$0xff] 0.0
    $region21: #{tpu_custom_call.1} parent=1 // pred_fallthru
      _
    %v63 = vld [vmem:[#allocation5] sm:$0xff]
    %v64 = vld [vmem:[#allocation5 + $0x8] sm:$0xff]
    %v65 = vxor.u32 %v63, 2147483648
    %v66 = vxor.u32 %v64, 2147483648
    %v67 = vmul.f32 %v65, 1.442695
    %v68 = vpow.pop %v67
    %v69 = vmul.f32 %v66, 1.442695
    %v70 = vpow.pop %v69
    %v71 = vadd.f32 %v68, 1.0
    %v72 = vadd.f32 %v70, 1.0
    %v73 = vrcp.pop %v71
    %v74 = vmul.f32 1.0, %v73
    %v75 = vrcp.pop %v72
    %v76 = vmul.f32 1.0, %v75
    %v77 = vld [vmem:[#allocation8] sm:$0xff]
    %v78 = vld [vmem:[#allocation8 + $0x8] sm:$0xff]
    %v79 = vld [vmem:[#allocation2] sm:$0xff]
    %v80 = vmul.f32 %v74, %v77
    %v81 = vmul.f32 %v76, %v78
    %v82 = vadd.f32 %v80, %v81
    %v83 = vadd.f32 %v79, %v82
    %84 = vst [vmem:[#allocation2] sm:$0xff] %v83
    %v85 = vld [vmem:[#allocation3] sm:$0xff]
    %v86 = vadd.f32 %v74, %v76
    %v87 = vadd.f32 %v85, %v86
    %88 = vst [vmem:[#allocation3] sm:$0xff] %v87
    %v89 = vld [vmem:[#allocation4] sm:$0xff]
    %v90 = vadd.f32 %v77, %v78
    %v91 = vadd.f32 %v89, %v90
    %92 = vst [vmem:[#allocation4] sm:$0xff] %v91
    // Predicated region
    $region22: #{tpu_custom_call.1} parent=1 // pred_check
      %p93 = pneg %p56
    $region23: #{tpu_custom_call.1} parent=1 // pred_check_branch
      %95 = sbr.rel (%p93) target = $region25
    $region24: #{tpu_custom_call.1} parent=1 // pred_region
      %v96 = vld [vmem:[#allocation2] sm:$0xff]
      %97 = vadd.xlane.f32.xlu0 %v96
      %v98 = vpop.xlane.xlu0 %97
      %v99 = vrot.slane %v98, 4
      %v100 = vadd.f32 %v98, %v99
      %v101 = vrot.slane %v100, 2
      %v102 = vadd.f32 %v100, %v101
      %v103 = vrot.slane %v102, 1
      %v104 = vadd.f32 %v102, %v103
      %s105 = vtos %v104
      %v106 = vstv %s105
      %vm107 = vcmask 0
      %108 = vst.msk [vmem:[#allocation10] sm:$0x1] %vm107, %v106
      %v109 = vld [vmem:[#allocation3] sm:$0xff]
      %110 = vadd.xlane.f32.xlu0 %v109
      %v111 = vpop.xlane.xlu0 %110
      %v112 = vrot.slane %v111, 4
      %v113 = vadd.f32 %v111, %v112
      %v114 = vrot.slane %v113, 2
      %v115 = vadd.f32 %v113, %v114
      %v116 = vrot.slane %v115, 1
      %v117 = vadd.f32 %v115, %v116
      %s118 = vtos %v117
      %v119 = vstv %s118
      %120 = vst.msk [vmem:[#allocation11] sm:$0x1] %vm107, %v119
      %v121 = vld [vmem:[#allocation4] sm:$0xff]
      %122 = vadd.xlane.f32.xlu0 %v121
      %v123 = vpop.xlane.xlu0 %122
      %v124 = vrot.slane %v123, 4
      %v125 = vadd.f32 %v123, %v124
      %v126 = vrot.slane %v125, 2
      %v127 = vadd.f32 %v125, %v126
      %v128 = vrot.slane %v127, 1
      %v129 = vadd.f32 %v127, %v128
      %s130 = vtos %v129
      %v131 = vstv %s130
      %132 = vst.msk [vmem:[#allocation13] sm:$0x1] %vm107, %v131
    $region25: #{tpu_custom_call.1} parent=1 // pred_fallthru
      _
    // Predicated region
    $region26: #{tpu_custom_call.1} parent=1 // pred_check
      _
    $region27: #{tpu_custom_call.1} parent=1 // pred_check_branch
      %134 = sbr.rel (0) target = $region29
    $region28: #{tpu_custom_call.1} parent=1 // pred_region
      %s136 = ssub.s32 16, 16
      %137 = vsyncadd [#allocation7], %s136
      %s139 = sshll.u32 [#allocation10], 4
      %s140 = int_to_ptr.vmem [resolvable:$true] %s139
      %142 = dma.vmem_to_hbm [thread:$0]  %s140, 16, %s2, [#allocation7]
    $region29: #{tpu_custom_call.1} parent=1 // pred_fallthru
      _
    // Predicated region
    $region30: #{tpu_custom_call.1} parent=1 // pred_check
      _
    $region31: #{tpu_custom_call.1} parent=1 // pred_check_branch
      %144 = sbr.rel (0) target = $region33
    $region32: #{tpu_custom_call.1} parent=1 // pred_region
      %s146 = ssub.s32 16, 16
      %147 = vsyncadd [#allocation12], %s146
      %s149 = sshll.u32 [#allocation11], 4
      %s150 = int_to_ptr.vmem [resolvable:$true] %s149
      %152 = dma.vmem_to_hbm [thread:$0]  %s150, 16, %s3, [#allocation12]
    $region33: #{tpu_custom_call.1} parent=1 // pred_fallthru
      _
    // Predicated region
    $region34: #{tpu_custom_call.1} parent=1 // pred_check
      _
    $region35: #{tpu_custom_call.1} parent=1 // pred_check_branch
      %154 = sbr.rel (0) target = $region37
    $region36: #{tpu_custom_call.1} parent=1 // pred_region
      %s156 = ssub.s32 16, 16
      %157 = vsyncadd [#allocation12], %s156
      %s159 = sshll.u32 [#allocation13], 4
      %s160 = int_to_ptr.vmem [resolvable:$true] %s159
      %162 = dma.vmem_to_hbm [thread:$0]  %s160, 16, %s4, [#allocation12]
    $region37: #{tpu_custom_call.1} parent=1 // pred_fallthru
      _
    // Predicated region
    $region38: #{tpu_custom_call.1} parent=1 // pred_check
      _
    $region39: #{tpu_custom_call.1} parent=1 // pred_check_branch
      %164 = sbr.rel (0) target = $region41
    $region40: #{tpu_custom_call.1} parent=1 // pred_region
      %165 = dma.done [#allocation7], 16
    $region41: #{tpu_custom_call.1} parent=1 // pred_fallthru
      _
    // Predicated region
    $region42: #{tpu_custom_call.1} parent=1 // pred_check
      _
    $region43: #{tpu_custom_call.1} parent=1 // pred_check_branch
      %167 = sbr.rel (0) target = $region45
    $region44: #{tpu_custom_call.1} parent=1 // pred_region
      %168 = dma.done [#allocation12], 16
    $region45: #{tpu_custom_call.1} parent=1 // pred_fallthru
      _
    // Predicated region
    $region46: #{tpu_custom_call.1} parent=1 // pred_check
      _
    $region47: #{tpu_custom_call.1} parent=1 // pred_check_branch
      %170 = sbr.rel (0) target = $region49
    $region48: #{tpu_custom_call.1} parent=1 // pred_region
      %171 = dma.done [#allocation12], 16
    $region49: #{tpu_custom_call.1} parent=1 // pred_fallthru
      _
    %172 = vsyncpa [#allocation6], 1
    %173 = vsyncpa [#allocation9], 1
    %174 = vsyncpa [#allocation7], 1
    %175 = vsyncpa [#allocation12], 1

</llo_original>
